<compile_context>
chip_gen: v7x
topology: tpu7x:2x2x1
jax: 0.10.0
libtpu: 0.0.40
codegen_flags: <defaults>
</compile_context>

<pallas_src>
import functools

import jax
import jax.numpy as jnp
from jax.experimental import pallas as pl
from jax.experimental.pallas import tpu as pltpu

# Max lanes per H*W chunk when chunking is needed (multiple of 128).
_HW_CHUNK_MAX = 16384


def _round_up(x, m):
    return ((x + m - 1) // m) * m


def _vmem_budgets():
    """Returns (in-flight input budget, vmem_limit_bytes), generation-aware."""
    vmem_cap = None
    try:
        vmem_cap = getattr(pltpu.get_tpu_info(), "vmem_capacity_bytes", None)
    except Exception:
        vmem_cap = None
    if vmem_cap is None:
        vmem_cap = 64 * 1024 * 1024                 # assume smallest (v7x)
    if vmem_cap >= 128 * 1024 * 1024:               # v5e / v6e: 128 MiB VMEM
        return 80 * 1024 * 1024, 104 * 1024 * 1024
    return 32 * 1024 * 1024, 48 * 1024 * 1024       # v7x: 64 MiB VMEM


def _dice_kernel(smooth, nc, hw, tile_r, tile_hw, mask_cols, mask_rows,
                 pred_ref, targ_ref, loss_ref, inter_acc, sum_acc):
    j = pl.program_id(1)
    last_j = pl.num_programs(1) - 1

    @pl.when(j == 0)
    def _():
        inter_acc[...] = jnp.zeros_like(inter_acc)
        sum_acc[...] = jnp.zeros_like(sum_acc)

    p = pred_ref[...].astype(jnp.float32)
    t = targ_ref[...].astype(jnp.float32)
    prod = p * t
    both = p + t            # psum + tsum folded into one reduction

    if mask_cols:
        # Only the last H*W chunk is ragged: keep the mask off the hot path.
        @pl.when(j != last_j)
        def _():
            inter_acc[...] += jnp.sum(prod, axis=1, keepdims=True)
            sum_acc[...] += jnp.sum(both, axis=1, keepdims=True)

        @pl.when(j == last_j)
        def _():
            col = j * tile_hw + jax.lax.broadcasted_iota(
                jnp.int32, (1, tile_hw), 1)
            valid = col < hw                  # (1, tile_hw), broadcasts over rows
            # NOTE: masking must happen BEFORE the reduction (OOB garbage).
            inter_acc[...] += jnp.sum(jnp.where(valid, prod, 0.0),
                                      axis=1, keepdims=True)
            sum_acc[...] += jnp.sum(jnp.where(valid, both, 0.0),
                                    axis=1, keepdims=True)
    else:
        inter_acc[...] += jnp.sum(prod, axis=1, keepdims=True)
        sum_acc[...] += jnp.sum(both, axis=1, keepdims=True)

    @pl.when(j == last_j)
    def _():
        loss = 1.0 - (2.0 * inter_acc[...] + smooth) / (sum_acc[...] + smooth)
        if mask_rows:  # static: only when N*C is not a multiple of tile_r
            i = pl.program_id(0)
            row = i * tile_r + jax.lax.broadcasted_iota(
                jnp.int32, (tile_r, 1), 0)
            loss = jnp.where(row < nc, loss, 0.0)   # keep masked rows exactly 0
        loss_ref[...] = loss


def dice_loss(pred, target, smooth=1.0):
    """Matches Dice_loss.forward: sum over (H, W) per (n, c), then mean."""
    assert pred.shape == target.shape and pred.ndim == 4
    n, c, h, w = pred.shape
    nc, hw = n * c, h * w

    p2 = pred.reshape(nc, hw)      # row-major reshape: no HBM copy
    t2 = target.reshape(nc, hw)
    itemsize = jnp.dtype(pred.dtype).itemsize
    # Sublane packing factor: 8 for f32, 16 for bf16/f16, 32 for int8/fp8.
    pack = 8 * max(1, 4 // itemsize)

    # --- H*W chunking (reduction axis, last in grid) ---
    if hw <= _HW_CHUNK_MAX:
        tile_hw = hw               # block == full dim, no lane constraint
        num_hw = 1
        mask_cols = False
    else:
        tile_hw = _HW_CHUNK_MAX    # multiple of 128
        num_hw = pl.cdiv(hw, tile_hw)
        mask_cols = (hw % tile_hw) != 0

    input_budget, vmem_limit = _vmem_budgets()

    # --- Row tile sized against the VMEM budget (no arbitrary row cap) ---
    # 2 inputs x 2 pipeline buffers, plus ~4 block-sized f32 in-kernel
    # temporaries (upcasts, p*t, p+t) so Mosaic-materialized intermediates
    # are covered by the budget as well.
    per_row_bytes = 2 * 2 * tile_hw * itemsize + 4 * tile_hw * 4
    nc_pad = _round_up(nc, pack)
    tile_r = max(input_budget // per_row_bytes, pack)
    tile_r = min(tile_r, nc_pad)
    tile_r = max((tile_r // pack) * pack, pack)

    # Give the 'parallel' row axis at least 2 tiles when N*C allows, so both
    # TensorCores on a v7x chip get work (no-op cost on 1-TC v5e/v6e).
    if pl.cdiv(nc, tile_r) == 1 and nc > pack:
        tile_r = _round_up(pl.cdiv(nc, 2), pack)

    num_r = pl.cdiv(nc, tile_r)
    mask_rows = (nc % tile_r) != 0
    # TODO(synk): for nc <= sublane-pack with huge H*W on v7x, split the H*W
    # reduction into parallel partial sums so the second TensorCore is used.

    per_row = pl.pallas_call(
        functools.partial(_dice_kernel, float(smooth), nc, hw,
                          tile_r, tile_hw, mask_cols, mask_rows),
        out_shape=jax.ShapeDtypeStruct((num_r * tile_r, 1), jnp.float32),
        grid_spec=pltpu.PrefetchScalarGridSpec(
            num_scalar_prefetch=0,
            grid=(num_r, num_hw),
            in_specs=[
                pl.BlockSpec((tile_r, tile_hw), lambda i, j: (i, j)),
                pl.BlockSpec((tile_r, tile_hw), lambda i, j: (i, j)),
            ],
            out_specs=pl.BlockSpec((tile_r, 1), lambda i, j: (i, 0)),
            scratch_shapes=[
                pltpu.VMEM((tile_r, 1), jnp.float32),  # intersection acc
                pltpu.VMEM((tile_r, 1), jnp.float32),  # (p + t) sum acc
            ],
        ),
        compiler_params=pltpu.CompilerParams(
            dimension_semantics=("parallel", "arbitrary"),
            vmem_limit_bytes=vmem_limit,
        ),
    )(p2, t2)

    # Masked tail rows are exactly 0, so sum/nc is the mean over true rows.
    return jnp.sum(per_row) / nc


if __name__ == "__main__":
    key = jax.random.PRNGKey(0)
    k1, k2 = jax.random.split(key)
    shape = (2, 4, 16, 16)  # (N, C, H, W)

    pred = jax.nn.sigmoid(jax.random.normal(k1, shape, dtype=jnp.float32))
    target = (jax.random.uniform(k2, shape) > 0.5).astype(jnp.float32)

    out = dice_loss(pred, target, smooth=1.0)
    out = jax.block_until_ready(out)

    # Pure-JAX reference of the PyTorch forward.
    inter = (pred * target).sum(axis=2).sum(axis=2)
    ref = (1.0 - (2.0 * inter + 1.0)
           / (pred.sum(axis=2).sum(axis=2)
              + target.sum(axis=2).sum(axis=2) + 1.0)).mean()
    assert jnp.allclose(out, ref, atol=1e-5, rtol=1e-5), (out, ref)

    print("KERNEL_OK")
</pallas_src>

<mosaic_0001>
module attributes {stable_mosaic.version = 11 : i64} {
  func.func @_dice_kernel(%arg0: i32, %arg1: i32, %arg2: memref<8x256xf32, #tpu.memory_space<vmem>>, %arg3: memref<8x256xf32, #tpu.memory_space<vmem>>, %arg4: memref<8x1xf32, #tpu.memory_space<vmem>>, %arg5: memref<8x1xf32, #tpu.memory_space<vmem>>, %arg6: memref<8x1xf32, #tpu.memory_space<vmem>>) attributes {dimension_semantics = [#tpu.dimension_semantics<parallel>, #tpu.dimension_semantics<arbitrary>], iteration_bounds = array<i64: 1, 1>, scalar_prefetch = 0 : i64, scratch_operands = 2 : i64, tpu.core_type = #tpu.core_type<tc>, window_params = [{transform_indices = @transform_0, window_bounds = array<i64: 8, 256>}, {transform_indices = @transform_1, window_bounds = array<i64: 8, 256>}, {transform_indices = @transform_2, window_bounds = array<i64: 8, 1>}]} {
    %c0_i32 = arith.constant 0 : i32
    %0 = arith.cmpi eq, %arg1, %c0_i32 : i32
    %1 = arith.extui %0 : i1 to i32
    %c0_i32_0 = arith.constant 0 : i32
    %2 = arith.cmpi ne, %1, %c0_i32_0 : i32
    scf.if %2 {
      %cst_15 = arith.constant 0.000000e+00 : f32
      %20 = vector.broadcast %cst_15 : f32 to vector<8x1xf32>
      %c0_16 = arith.constant 0 : index
      %c0_17 = arith.constant 0 : index
      %21 = vector.load %arg5[%c0_16, %c0_17] : memref<8x1xf32, #tpu.memory_space<vmem>>, vector<8x1xf32>
      tpu.vector_store %arg5[%c0_16, %c0_17], %20 {strides = array<i32>} : memref<8x1xf32, #tpu.memory_space<vmem>>, vector<8x1xf32>,
      %cst_18 = arith.constant 0.000000e+00 : f32
      %22 = vector.broadcast %cst_18 : f32 to vector<8x1xf32>
      %c0_19 = arith.constant 0 : index
      %c0_20 = arith.constant 0 : index
      %23 = vector.load %arg6[%c0_19, %c0_20] : memref<8x1xf32, #tpu.memory_space<vmem>>, vector<8x1xf32>
      tpu.vector_store %arg6[%c0_19, %c0_20], %22 {strides = array<i32>} : memref<8x1xf32, #tpu.memory_space<vmem>>, vector<8x1xf32>,
    } else {
    }
    %c0 = arith.constant 0 : index
    %c0_1 = arith.constant 0 : index
    %3 = vector.load %arg2[%c0, %c0_1] : memref<8x256xf32, #tpu.memory_space<vmem>>, vector<8x256xf32>
    %c0_2 = arith.constant 0 : index
    %c0_3 = arith.constant 0 : index
    %4 = vector.load %arg3[%c0_2, %c0_3] : memref<8x256xf32, #tpu.memory_space<vmem>>, vector<8x256xf32>
    %5 = arith.mulf %3, %4 : vector<8x256xf32>
    %6 = arith.addf %3, %4 : vector<8x256xf32>
    %c0_4 = arith.constant 0 : index
    %c0_5 = arith.constant 0 : index
    %7 = vector.load %arg5[%c0_4, %c0_5] : memref<8x1xf32, #tpu.memory_space<vmem>>, vector<8x1xf32>
    %cst = arith.constant dense<0.000000e+00> : vector<8xf32>
    %8 = vector.multi_reduction <add>, %5, %cst [1] : vector<8x256xf32> to vector<8xf32>
    %9 = vector.shape_cast %8 : vector<8xf32> to vector<8x1xf32>
    %10 = arith.addf %7, %9 : vector<8x1xf32>
    %c0_6 = arith.constant 0 : index
    %c0_7 = arith.constant 0 : index
    %11 = vector.load %arg5[%c0_6, %c0_7] : memref<8x1xf32, #tpu.memory_space<vmem>>, vector<8x1xf32>
    tpu.vector_store %arg5[%c0_6, %c0_7], %10 {strides = array<i32>} : memref<8x1xf32, #tpu.memory_space<vmem>>, vector<8x1xf32>,
    %c0_8 = arith.constant 0 : index
    %c0_9 = arith.constant 0 : index
    %12 = vector.load %arg6[%c0_8, %c0_9] : memref<8x1xf32, #tpu.memory_space<vmem>>, vector<8x1xf32>
    %cst_10 = arith.constant dense<0.000000e+00> : vector<8xf32>
    %13 = vector.multi_reduction <add>, %6, %cst_10 [1] : vector<8x256xf32> to vector<8xf32>
    %14 = vector.shape_cast %13 : vector<8xf32> to vector<8x1xf32>
    %15 = arith.addf %12, %14 : vector<8x1xf32>
    %c0_11 = arith.constant 0 : index
    %c0_12 = arith.constant 0 : index
    %16 = vector.load %arg6[%c0_11, %c0_12] : memref<8x1xf32, #tpu.memory_space<vmem>>, vector<8x1xf32>
    tpu.vector_store %arg6[%c0_11, %c0_12], %15 {strides = array<i32>} : memref<8x1xf32, #tpu.memory_space<vmem>>, vector<8x1xf32>,
    %c0_i32_13 = arith.constant 0 : i32
    %17 = arith.cmpi eq, %arg1, %c0_i32_13 : i32
    %18 = arith.extui %17 : i1 to i32
    %c0_i32_14 = arith.constant 0 : i32
    %19 = arith.cmpi ne, %18, %c0_i32_14 : i32
    scf.if %19 {
      %c0_15 = arith.constant 0 : index
      %c0_16 = arith.constant 0 : index
      %20 = vector.load %arg5[%c0_15, %c0_16] : memref<8x1xf32, #tpu.memory_space<vmem>>, vector<8x1xf32>
      %cst_17 = arith.constant 2.000000e+00 : f32
      %21 = vector.broadcast %cst_17 : f32 to vector<8x1xf32>
      %22 = arith.mulf %21, %20 : vector<8x1xf32>
      %cst_18 = arith.constant 1.000000e+00 : f32
      %23 = vector.broadcast %cst_18 : f32 to vector<8x1xf32>
      %24 = arith.addf %22, %23 : vector<8x1xf32>
      %c0_19 = arith.constant 0 : index
      %c0_20 = arith.constant 0 : index
      %25 = vector.load %arg6[%c0_19, %c0_20] : memref<8x1xf32, #tpu.memory_space<vmem>>, vector<8x1xf32>
      %cst_21 = arith.constant 1.000000e+00 : f32
      %26 = vector.broadcast %cst_21 : f32 to vector<8x1xf32>
      %27 = arith.addf %25, %26 : vector<8x1xf32>
      %28 = arith.divf %24, %27 : vector<8x1xf32>
      %cst_22 = arith.constant 1.000000e+00 : f32
      %29 = vector.broadcast %cst_22 : f32 to vector<8x1xf32>
      %30 = arith.subf %29, %28 : vector<8x1xf32>
      %c0_23 = arith.constant 0 : index
      %c0_24 = arith.constant 0 : index
      %31 = vector.load %arg4[%c0_23, %c0_24] : memref<8x1xf32, #tpu.memory_space<vmem>>, vector<8x1xf32>
      tpu.vector_store %arg4[%c0_23, %c0_24], %30 {strides = array<i32>} : memref<8x1xf32, #tpu.memory_space<vmem>>, vector<8x1xf32>,
    } else {
    }
    return
  }
  func.func @transform_0(%arg0: i32, %arg1: i32) -> (i32, i32) {
    %c0_i32 = arith.constant 0 : i32
    return %arg0, %arg1 : i32, i32
  }
  func.func @transform_1(%arg0: i32, %arg1: i32) -> (i32, i32) {
    %c0_i32 = arith.constant 0 : i32
    return %arg0, %arg1 : i32, i32
  }
  func.func @transform_2(%arg0: i32, %arg1: i32) -> (i32, i32) {
    %c0_i32 = arith.constant 0 : i32
    %c0_i32_0 = arith.constant 0 : i32
    return %arg0, %c0_i32 : i32, i32
  }
}

</mosaic_0001>

<llo_original>
// kernel: tpu_custom_call.1
$region0: #{tpu_custom_call.1}
  #allocation0 [shape = 'u32[]', space=smem, size = 0x4, offset = 0x4, fixed_abs, tag = 'smem constant byte address 0x4 - core index']
  #allocation1 [shape = 'u32[144,128]{1,0:T(1,128)}', space=vmem, size = 0x12000, scoped, tag = 'internal scratch']
  #allocation2 [shape = 'f32[8,1]{1,0:T(8,128)}', space=vmem, size = 0x1000, scoped, tag = 'scratch operand']
  #allocation3 [shape = 'f32[8,1]{1,0:T(8,128)}', space=vmem, size = 0x1000, scoped, tag = 'scratch operand']
  %s0 = inlined_call_operand.hbm [shape: f32[8,256], index: 0, kind: input, shape index: {}]
  %s1 = inlined_call_operand.hbm [shape: f32[8,256], index: 1, kind: input, shape index: {}]
  %s2 = inlined_call_operand.vmem [shape: f32[8,1], index: 2, kind: output, shape index: {}]
  %s3 = sld [smem:[#allocation0]]
  $region34: #{tpu_custom_call.1} parent=0
    _
  %s5 = ssub.s32 1, %s3
  %s6 = scalar_select 0, %s5, %s3
  $region1: #{tpu_custom_call.1} parent=0
    #allocation4 [shape = 'u8[8192]{0}', space=vmem, size = 0x2000, scoped, tag = 'input window, operand 0, single buffered']
    #allocation5 [shape = 's32[1]{0}', space=sflag, size = 0x4, scoped, tag = 'scoped memory for tpu_custom_call.1']
    #allocation6 [shape = 'u8[8192]{0}', space=vmem, size = 0x2000, scoped, tag = 'input window, operand 1, single buffered']
    #allocation7 [shape = 's32[1]{0}', space=sflag, size = 0x4, scoped, tag = 'scoped memory for tpu_custom_call.1']
    %7 = vsyncpa [#allocation5], 0
    %8 = vsyncpa [#allocation7], 0
    // Predicated region
    $region2: #{tpu_custom_call.1} parent=1 // pred_check
      _
    $region3: #{tpu_custom_call.1} parent=1 // pred_check_branch
      %10 = sbr.rel (0) target = $region5
    $region4: #{tpu_custom_call.1} parent=1 // pred_region
      %s12 = ssub.s32 256, 256
      %13 = vsyncadd [#allocation5], %s12
      %s15 = sshll.u32 [#allocation4], 4
      %s16 = int_to_ptr.vmem [resolvable:$true] %s15
      %18 = dma.hbm_to_vmem [thread:$0]  %s0, 256, %s16, [#allocation5]
    $region5: #{tpu_custom_call.1} parent=1 // pred_fallthru
      _
    // Predicated region
    $region6: #{tpu_custom_call.1} parent=1 // pred_check
      _
    $region7: #{tpu_custom_call.1} parent=1 // pred_check_branch
      %20 = sbr.rel (0) target = $region9
    $region8: #{tpu_custom_call.1} parent=1 // pred_region
      %s22 = ssub.s32 256, 256
      %23 = vsyncadd [#allocation7], %s22
      %s25 = sshll.u32 [#allocation6], 4
      %s26 = int_to_ptr.vmem [resolvable:$true] %s25
      %28 = dma.hbm_to_vmem [thread:$0]  %s1, 256, %s26, [#allocation7]
    $region9: #{tpu_custom_call.1} parent=1 // pred_fallthru
      _
    // Predicated region
    $region10: #{tpu_custom_call.1} parent=1 // pred_check
      _
    $region11: #{tpu_custom_call.1} parent=1 // pred_check_branch
      %30 = sbr.rel (0) target = $region13
    $region12: #{tpu_custom_call.1} parent=1 // pred_region
      %31 = dma.done [#allocation5], 256
    $region13: #{tpu_custom_call.1} parent=1 // pred_fallthru
      _
    // Predicated region
    $region14: #{tpu_custom_call.1} parent=1 // pred_check
      _
    $region15: #{tpu_custom_call.1} parent=1 // pred_check_branch
      %33 = sbr.rel (0) target = $region17
    $region16: #{tpu_custom_call.1} parent=1 // pred_region
      %34 = dma.done [#allocation7], 256
    $region17: #{tpu_custom_call.1} parent=1 // pred_fallthru
      _
    %p35 = scmp.eq.s32.totalorder 0, 0
    // Predicated region
    $region18: #{tpu_custom_call.1} parent=1 // pred_check
      %p36 = pneg %p35
    $region19: #{tpu_custom_call.1} parent=1 // pred_check_branch
      %38 = sbr.rel (%p36) target = $region21
    $region20: #{tpu_custom_call.1} parent=1 // pred_region
      %vm39 = vcmask 7168
      %40 = vst.msk [vmem:[#allocation2] sm:$0xff] %vm39, 0.0
      %41 = vst.msk [vmem:[#allocation3] sm:$0xff] %vm39, 0.0
    $region21: #{tpu_custom_call.1} parent=1 // pred_fallthru
      _
    %v42 = vld [vmem:[#allocation4] sm:$0xff]
    %v43 = vld [vmem:[#allocation4 + $0x8] sm:$0xff]
    %v44 = vld [vmem:[#allocation6] sm:$0xff]
    %v45 = vld [vmem:[#allocation6 + $0x8] sm:$0xff]
    %v46 = vmul.f32 %v42, %v44
    %v47 = vmul.f32 %v43, %v45
    %v48 = vadd.f32 %v42, %v44
    %v49 = vadd.f32 %v43, %v45
    %v50 = vld [vmem:[#allocation2] sm:$0xff]
    %v51 = vadd.f32 %v46, %v47
    %52 = vadd.xlane.f32.xlu0 %v51
    %v53 = vpop.xlane.xlu0 %52
    %v54 = vadd.f32 %v50, %v53
    %vm55 = vcmask 7168
    %56 = vst.msk [vmem:[#allocation2] sm:$0xff] %vm55, %v54
    %v57 = vld [vmem:[#allocation3] sm:$0xff]
    %v58 = vadd.f32 %v48, %v49
    %59 = vadd.xlane.f32.xlu0 %v58
    %v60 = vpop.xlane.xlu0 %59
    %v61 = vadd.f32 %v57, %v60
    %62 = vst.msk [vmem:[#allocation3] sm:$0xff] %vm55, %v61
    // Predicated region
    $region22: #{tpu_custom_call.1} parent=1 // pred_check
      %p63 = pneg %p35
    $region23: #{tpu_custom_call.1} parent=1 // pred_check_branch
      %65 = sbr.rel (%p63) target = $region25
    $region24: #{tpu_custom_call.1} parent=1 // pred_region
      %v66 = vld [vmem:[#allocation2] sm:$0xff]
      %v67 = vmul.f32 %v66, 2.0
      %v68 = vadd.f32 %v67, 1.0
      %v69 = vld [vmem:[#allocation3] sm:$0xff]
      %v70 = vadd.f32 %v69, 1.0
      %v71 = vrcp.pop %v70
      %v72 = vmul.f32 %v68, %v71
      %v73 = vsub.f32 1.0, %v72
      %74 = vst.msk [vmem:[%s2] sm:$0xff] %vm55, %v73
    $region25: #{tpu_custom_call.1} parent=1 // pred_fallthru
      _
    // Predicated region
    $region26: #{tpu_custom_call.1} parent=1 // pred_check
      _
    $region27: #{tpu_custom_call.1} parent=1 // pred_check_branch
      %76 = sbr.rel (0) target = $region29
    $region28: #{tpu_custom_call.1} parent=1 // pred_region
      _
    $region29: #{tpu_custom_call.1} parent=1 // pred_fallthru
      _
    // Predicated region
    $region30: #{tpu_custom_call.1} parent=1 // pred_check
      _
    $region31: #{tpu_custom_call.1} parent=1 // pred_check_branch
      %78 = sbr.rel (0) target = $region33
    $region32: #{tpu_custom_call.1} parent=1 // pred_region
      _
    $region33: #{tpu_custom_call.1} parent=1 // pred_fallthru
      _
    %79 = vsyncpa [#allocation5], 1
    %80 = vsyncpa [#allocation7], 1

</llo_original>
